<compile_context>
chip_gen: v7x
topology: tpu7x:2x2x1
jax: 0.10.0
libtpu: 0.0.40
codegen_flags: <defaults>
</compile_context>

<pallas_src>
import functools
import math

import jax
import jax.numpy as jnp
from jax.experimental import pallas as pl
from jax.experimental.pallas import tpu as pltpu

_OUT_LANES = 128  # lane-dense output slab width


def _head_kernel(feat_ref, params_ref, out_ref, *, C, scale_x, scale_y,
                 z_min, z_max, pred_inv_z, pred_inv_z_synsin,
                 z_pred_scaling, z_pred_offset):
    """Single block = whole problem.

    feat_ref   : (R, C)        NHWC features flattened over (B, H, W)
    params_ref : (C+8, 128)    rows [0,C) = padded head weights, row C = bias
    out_ref    : (R, 128)      lane 0,1 = xy offsets, lane 2 = z grid, rest 0
    """
    x = feat_ref[...]                                       # (R, C)
    w = params_ref[0:C, :]                                  # (C, 128)
    b = params_ref[C:C + 1, :]                              # (1, 128)

    # 1x1-conv heads as one per-pixel matmul; lane axis = 128 output channels
    # (only 3 are real, but the MXU/stores stay full-width and unmasked).
    logits = jnp.dot(x, w, preferred_element_type=jnp.float32) + b   # (R, 128)

    R = logits.shape[0]
    lane = jax.lax.broadcasted_iota(jnp.int32, (R, _OUT_LANES), 1)

    # xy path: tanh then per-channel scaling (scales baked in as constants).
    scale = jnp.where(lane == 0, scale_x,
                      jnp.where(lane == 1, scale_y, 1.0)).astype(jnp.float32)
    xy_val = jnp.tanh(logits) * scale

    # z path (branch is Python-static, baked in at trace time); computed at
    # full vreg width, lane 2 selected below.
    if pred_inv_z_synsin:
        s = jax.nn.sigmoid(logits - 2.8)
        z = pl.reciprocal(s * 10.0 + 0.01, approx=True) - 0.1
        z = z * z_pred_scaling + z_pred_offset
        z_val = jnp.clip(z, z_min, z_max)
    elif pred_inv_z:
        s = jax.nn.sigmoid(logits)
        z = pl.reciprocal(s * 0.75 + 0.01, approx=True) - 1.0
        z = z * z_pred_scaling + z_pred_offset
        z_val = jnp.clip(z, z_min, z_max)
    else:
        z_val = z_min + jax.nn.sigmoid(logits) * (z_max - z_min)

    out = jnp.where(lane < 2, xy_val, jnp.where(lane == 2, z_val, 0.0))
    out_ref[...] = out.astype(out_ref.dtype)


def offset_and_z_grid_heads(features_nhwc, head_params, *,
                            grid_H, grid_W, z_min, z_max, pred_inv_z,
                            pred_inv_z_synsin, z_pred_scaling, z_pred_offset):
    """1x1-conv heads + post-processing as a single-block Pallas kernel.

    features_nhwc : (B, gH, gW, C) float32
    head_params   : (C+8, 128) float32  (padded weights + bias row)
    returns (xy_offset (B, HW, 2), z_grid (B, HW, 1))
    """
    B, H, W, C = features_nhwc.shape
    assert (H, W) == (grid_H, grid_W)
    HW = H * W
    R = B * HW

    feats = features_nhwc.reshape(R, C).astype(jnp.float32)

    kernel = functools.partial(
        _head_kernel,
        C=C,
        scale_x=1.0 / (grid_W - 1), scale_y=1.0 / (grid_H - 1),
        z_min=z_min, z_max=z_max,
        pred_inv_z=pred_inv_z, pred_inv_z_synsin=pred_inv_z_synsin,
        z_pred_scaling=z_pred_scaling, z_pred_offset=z_pred_offset)

    out_slab = pl.pallas_call(
        kernel,
        out_shape=jax.ShapeDtypeStruct((R, _OUT_LANES), jnp.float32),
        grid=(1,),
        in_specs=[
            pl.BlockSpec((R, C), lambda i: (0, 0)),                 # features
            pl.BlockSpec(head_params.shape, lambda i: (0, 0)),      # W | bias
        ],
        out_specs=pl.BlockSpec((R, _OUT_LANES), lambda i: (0, 0)),
        compiler_params=pltpu.CompilerParams(
            dimension_semantics=("arbitrary",)),
    )(feats, head_params)

    # Pure-index glue on the tiny 3-channel result: spatial flip([1,2]) commutes
    # with the per-pixel heads, so apply it here instead of to C-wide features.
    head = out_slab[:, :3].reshape(B, H, W, 3)
    head = head[:, ::-1, ::-1, :]
    xy_offset = head[..., 0:2].reshape(B, HW, 2)
    z_grid = head[..., 2:3].reshape(B, HW, 1)
    return xy_offset, z_grid


class OffsetAndZGridPredictorPallas:
    """JAX/Pallas re-implementation of OffsetAndZGridPredictor.forward.

    Only the grid_stride >= resnet_grid_stride case with downsample_stride == 1
    is exercised (Conv2d heads, kernel_size=1, stride=1, no output slicing),
    matching grid_stride == 8 in the original module.
    """

    def __init__(self, grid_stride, grid_H, grid_W, z_min, z_max, pred_inv_z,
                 pred_inv_z_synsin, z_pred_scaling, z_pred_offset,
                 backbone_dim, key):
        assert grid_stride % 2 == 0
        self.grid_stride = grid_stride
        self.pad = grid_stride // 2
        self.backbone_dim = backbone_dim
        self.grid_H = grid_H
        self.grid_W = grid_W
        self.z_min = z_min
        self.z_max = z_max
        self.pred_inv_z = pred_inv_z
        self.pred_inv_z_synsin = pred_inv_z_synsin
        self.z_pred_scaling = z_pred_scaling
        self.z_pred_offset = z_pred_offset

        resnet_grid_stride = min(max(grid_stride, 8), 32)
        assert grid_stride % resnet_grid_stride == 0
        assert grid_stride // resnet_grid_stride == 1  # downsample_stride == 1
        self.slice_b = 0
        self.slice_e = 0

        k1, k2, k3, k4, k5 = jax.random.split(key, 5)

        # --- backbone stand-in: overlapping patchify conv (glue, not Pallas) ---
        # TODO(synk): pretrained ResNet backbone replaced by deterministic conv.
        ksz = grid_stride + 2 * self.pad
        fan_in = 3 * ksz * ksz
        self.backbone_w = (jax.random.normal(k1, (backbone_dim, 3, ksz, ksz),
                                             jnp.float32)
                           / math.sqrt(fan_in))
        self.backbone_b = 0.01 * jax.random.normal(k2, (backbone_dim,),
                                                   jnp.float32)

        # --- prediction heads: Conv2d(C, 2, 1) and Conv2d(C, 1, 1) ---
        # Stored pre-padded into a single lane-dense (C+8, 128) operand:
        #   rows [0, C): weights (lane 0,1 = xy, lane 2 = z), row C: bias.
        C = backbone_dim
        w_xy = jax.random.normal(k3, (C, 2), jnp.float32) / math.sqrt(C)
        w_z = jax.random.normal(k4, (C, 1), jnp.float32) / math.sqrt(C)
        bias = 0.01 * jax.random.normal(k5, (1, 3), jnp.float32)

        params = jnp.zeros((C + 8, _OUT_LANES), jnp.float32)
        params = params.at[0:C, 0:2].set(w_xy)
        params = params.at[0:C, 2:3].set(w_z)
        params = params.at[C, 0:3].set(bias[0])
        self.head_params = params

    def backbone_features(self, img_nchw):
        pad = self.pad
        img_pad = jnp.pad(img_nchw,
                          ((0, 0), (0, 0), (pad, pad), (pad, pad)),
                          mode="edge")  # replicate pad
        feats = jax.lax.conv_general_dilated(
            img_pad, self.backbone_w,
            window_strides=(self.grid_stride, self.grid_stride),
            padding="VALID",
            dimension_numbers=("NCHW", "OIHW", "NHWC"))  # emit NHWC directly
        feats = feats + self.backbone_b[None, None, None, :]
        feats = jnp.maximum(feats, 0.0)
        return feats                                      # (B, gH, gW, C)

    def __call__(self, img):
        assert img.shape[1] == 3, "The input image must be in NCHW format."
        features = self.backbone_features(img)
        xy_offset, z_grid = offset_and_z_grid_heads(
            features, self.head_params,
            grid_H=self.grid_H, grid_W=self.grid_W,
            z_min=self.z_min, z_max=self.z_max,
            pred_inv_z=self.pred_inv_z,
            pred_inv_z_synsin=self.pred_inv_z_synsin,
            z_pred_scaling=self.z_pred_scaling,
            z_pred_offset=self.z_pred_offset)
        return xy_offset, z_grid


def _reference_heads(model, features_nhwc):
    """Pure-JAX reference for the head math (non-inv-z branch of the demo)."""
    B, H, W, C = features_nhwc.shape
    w = model.head_params[0:C, 0:3]
    b = model.head_params[C, 0:3]
    logits = jnp.einsum("bhwc,cd->bhwd", features_nhwc, w,
                        precision=jax.lax.Precision.HIGHEST) + b
    logits = logits[:, ::-1, ::-1, :]
    scale = jnp.array([1.0 / (model.grid_W - 1), 1.0 / (model.grid_H - 1)],
                      jnp.float32)
    xy = jnp.tanh(logits[..., 0:2]) * scale
    z = model.z_min + jax.nn.sigmoid(logits[..., 2:3]) * (model.z_max - model.z_min)
    return xy.reshape(B, H * W, 2), z.reshape(B, H * W, 1)


if __name__ == "__main__":
    key = jax.random.PRNGKey(0)
    k_param, k_img = jax.random.split(key)

    grid_stride = 8
    grid_H, grid_W = 8, 8
    backbone_dim = 32
    batch = 2
    img_H = grid_H * grid_stride   # 64
    img_W = grid_W * grid_stride   # 64

    model = OffsetAndZGridPredictorPallas(
        grid_stride=grid_stride, grid_H=grid_H, grid_W=grid_W,
        z_min=1.0, z_max=10.0,
        pred_inv_z=False, pred_inv_z_synsin=False,
        z_pred_scaling=1.0, z_pred_offset=0.0,
        backbone_dim=backbone_dim, key=k_param)

    img = jax.random.normal(k_img, (batch, 3, img_H, img_W), jnp.float32)

    xy_offset, z_grid = model(img)
    xy_offset = jax.block_until_ready(xy_offset)
    z_grid = jax.block_until_ready(z_grid)

    assert xy_offset.shape == (batch, grid_H * grid_W, 2), xy_offset.shape
    assert z_grid.shape == (batch, grid_H * grid_W, 1), z_grid.shape
    assert bool(jnp.all(jnp.isfinite(xy_offset)))
    assert bool(jnp.all(jnp.isfinite(z_grid)))
    # z range sanity (non-inv-z branch maps into [z_min, z_max]).
    assert bool(jnp.all(z_grid >= 1.0)) and bool(jnp.all(z_grid <= 10.0))

    # Cross-check against a pure-JAX reference of the head math.
    feats = model.backbone_features(img)
    xy_ref, z_ref = _reference_heads(model, feats)
    assert bool(jnp.allclose(xy_offset, xy_ref, atol=1e-3, rtol=1e-3))
    assert bool(jnp.allclose(z_grid, z_ref, atol=1e-2, rtol=1e-3))

    print("KERNEL_OK")
</pallas_src>

<mosaic_0001>
module attributes {stable_mosaic.version = 11 : i64} {
  func.func @_head_kernel(%arg0: i32, %arg1: memref<128x32xf32, #tpu.memory_space<vmem>>, %arg2: memref<40x128xf32, #tpu.memory_space<vmem>>, %arg3: memref<128x128xf32, #tpu.memory_space<vmem>>) attributes {dimension_semantics = [#tpu.dimension_semantics<arbitrary>], iteration_bounds = array<i64: 1>, scalar_prefetch = 0 : i64, scratch_operands = 0 : i64, tpu.core_type = #tpu.core_type<tc>, window_params = [{pipeline_mode = #tpu.pipeline_mode<synchronous>, transform_indices = @transform_0, window_bounds = array<i64: 128, 32>}, {pipeline_mode = #tpu.pipeline_mode<synchronous>, transform_indices = @transform_1, window_bounds = array<i64: 40, 128>}, {pipeline_mode = #tpu.pipeline_mode<synchronous>, transform_indices = @transform_2, window_bounds = array<i64: 128, 128>}]} {
    %c0 = arith.constant 0 : index
    %c0_0 = arith.constant 0 : index
    %0 = vector.load %arg1[%c0, %c0_0] : memref<128x32xf32, #tpu.memory_space<vmem>>, vector<128x32xf32>
    %c0_1 = arith.constant 0 : index
    %c0_2 = arith.constant 0 : index
    %1 = vector.load %arg2[%c0_1, %c0_2] : memref<40x128xf32, #tpu.memory_space<vmem>>, vector<32x128xf32>
    %c32 = arith.constant 32 : index
    %c0_3 = arith.constant 0 : index
    %2 = vector.load %arg2[%c32, %c0_3] : memref<40x128xf32, #tpu.memory_space<vmem>>, vector<1x128xf32>
    %cst = arith.constant dense<0.000000e+00> : vector<128x128xf32>
    %3 = tpu.matmul %0, %1, %cst {dimension_numbers = #tpu.dot_dimension_numbers<[1], [0], [0], [1], [0, 0, 1, 1], [], []>} : vector<128x32xf32>, vector<32x128xf32>, vector<128x128xf32> -> vector<128x128xf32>
    %4 = vector.broadcast %2 : vector<1x128xf32> to vector<128x128xf32>
    %5 = arith.addf %3, %4 : vector<128x128xf32>
    %6 = tpu.iota {dimensions = array<i32: 1>} : vector<128x128xi32>
    %c0_i32 = arith.constant 0 : i32
    %7 = vector.broadcast %c0_i32 : i32 to vector<128x128xi32>
    %8 = arith.cmpi eq, %6, %7 : vector<128x128xi32>
    %c1_i32 = arith.constant 1 : i32
    %9 = vector.broadcast %c1_i32 : i32 to vector<128x128xi32>
    %10 = arith.cmpi eq, %6, %9 : vector<128x128xi32>
    %cst_4 = arith.constant 0.142857149 : f32
    %cst_5 = arith.constant 1.000000e+00 : f32
    %11 = vector.broadcast %cst_4 : f32 to vector<128x128xf32>
    %12 = vector.broadcast %cst_5 : f32 to vector<128x128xf32>
    %13 = arith.select %10, %11, %12 : vector<128x128xi1>, vector<128x128xf32>
    %cst_6 = arith.constant 0.142857149 : f32
    %14 = vector.broadcast %cst_6 : f32 to vector<128x128xf32>
    %15 = arith.select %8, %14, %13 : vector<128x128xi1>, vector<128x128xf32>
    %16 = math.tanh %5 : vector<128x128xf32>
    %17 = arith.mulf %16, %15 : vector<128x128xf32>
    %18 = arith.negf %5 : vector<128x128xf32>
    %19 = math.exp %18 : vector<128x128xf32>
    %cst_7 = arith.constant 1.000000e+00 : f32
    %20 = vector.broadcast %cst_7 : f32 to vector<128x128xf32>
    %21 = arith.addf %20, %19 : vector<128x128xf32>
    %22 = arith.divf %20, %21 : vector<128x128xf32>
    %cst_8 = arith.constant 9.000000e+00 : f32
    %23 = vector.broadcast %cst_8 : f32 to vector<128x128xf32>
    %24 = arith.mulf %22, %23 : vector<128x128xf32>
    %cst_9 = arith.constant 1.000000e+00 : f32
    %25 = vector.broadcast %cst_9 : f32 to vector<128x128xf32>
    %26 = arith.addf %25, %24 : vector<128x128xf32>
    %c2_i32 = arith.constant 2 : i32
    %27 = vector.broadcast %c2_i32 : i32 to vector<128x128xi32>
    %28 = arith.cmpi slt, %6, %27 : vector<128x128xi32>
    %c2_i32_10 = arith.constant 2 : i32
    %29 = vector.broadcast %c2_i32_10 : i32 to vector<128x128xi32>
    %30 = arith.cmpi eq, %6, %29 : vector<128x128xi32>
    %cst_11 = arith.constant 0.000000e+00 : f32
    %31 = vector.broadcast %cst_11 : f32 to vector<128x128xf32>
    %32 = arith.select %30, %26, %31 : vector<128x128xi1>, vector<128x128xf32>
    %33 = arith.select %28, %17, %32 : vector<128x128xi1>, vector<128x128xf32>
    %c0_12 = arith.constant 0 : index
    %c0_13 = arith.constant 0 : index
    %34 = vector.load %arg3[%c0_12, %c0_13] : memref<128x128xf32, #tpu.memory_space<vmem>>, vector<128x128xf32>
    tpu.vector_store %arg3[%c0_12, %c0_13], %33 {strides = array<i32>} : memref<128x128xf32, #tpu.memory_space<vmem>>, vector<128x128xf32>,
    return
  }
  func.func @transform_0(%arg0: i32) -> (i32, i32) {
    %c0_i32 = arith.constant 0 : i32
    %c0_i32_0 = arith.constant 0 : i32
    %c0_i32_1 = arith.constant 0 : i32
    return %c0_i32, %c0_i32_0 : i32, i32
  }
  func.func @transform_1(%arg0: i32) -> (i32, i32) {
    %c0_i32 = arith.constant 0 : i32
    %c0_i32_0 = arith.constant 0 : i32
    %c0_i32_1 = arith.constant 0 : i32
    return %c0_i32, %c0_i32_0 : i32, i32
  }
  func.func @transform_2(%arg0: i32) -> (i32, i32) {
    %c0_i32 = arith.constant 0 : i32
    %c0_i32_0 = arith.constant 0 : i32
    %c0_i32_1 = arith.constant 0 : i32
    return %c0_i32, %c0_i32_0 : i32, i32
  }
}

</mosaic_0001>

<llo_original>
// kernel: tpu_custom_call.1
$region0: #{tpu_custom_call.1}
  #allocation0 [shape = 'u32[]', space=smem, size = 0x4, offset = 0x4, fixed_abs, tag = 'smem constant byte address 0x4 - core index']
  #allocation1 [shape = 'u32[144,128]{1,0:T(1,128)}', space=vmem, size = 0x12000, scoped, tag = 'internal scratch']
  %s0 = inlined_call_operand.vmem [shape: f32[128,32], index: 0, kind: input, shape index: {}]
  %s1 = inlined_call_operand.vmem [shape: f32[40,128], index: 1, kind: input, shape index: {}]
  %s2 = inlined_call_operand.hbm [shape: f32[128,128], index: 2, kind: output, shape index: {}]
  %s3 = sld [smem:[#allocation0]]
  $region18: #{tpu_custom_call.1} parent=0
    _
  %s5 = ssub.s32 1, %s3
  %s6 = scalar_select 0, %s5, %s3
  $region1: #{tpu_custom_call.1} parent=0
    #allocation2 [shape = 'u8[65536]{0}', space=vmem, size = 0x10000, scoped, tag = 'output window, operand 0, single buffered']
    #allocation3 [shape = 's32[1]{0}', space=sflag, size = 0x4, scoped, tag = 'scoped memory for tpu_custom_call.1']
    %7 = vsyncpa [#allocation3], 0
    // Predicated region
    $region2: #{tpu_custom_call.1} parent=1 // pred_check
      _
    $region3: #{tpu_custom_call.1} parent=1 // pred_check_branch
      %9 = sbr.rel (0) target = $region5
    $region4: #{tpu_custom_call.1} parent=1 // pred_region
      _
    $region5: #{tpu_custom_call.1} parent=1 // pred_fallthru
      _
    // Predicated region
    $region6: #{tpu_custom_call.1} parent=1 // pred_check
      _
    $region7: #{tpu_custom_call.1} parent=1 // pred_check_branch
      %11 = sbr.rel (0) target = $region9
    $region8: #{tpu_custom_call.1} parent=1 // pred_region
      _
    $region9: #{tpu_custom_call.1} parent=1 // pred_fallthru
      _
    %v12 = vld [vmem:[%s0] sm:$0xff]
    %v13 = vld [vmem:[%s0 + $0x8] sm:$0xff]
    %v14 = vld [vmem:[%s0 + $0x10] sm:$0xff]
    %v15 = vld [vmem:[%s0 + $0x18] sm:$0xff]
    %v16 = vld [vmem:[%s0 + $0x20] sm:$0xff]
    %v17 = vld [vmem:[%s0 + $0x28] sm:$0xff]
    %v18 = vld [vmem:[%s0 + $0x30] sm:$0xff]
    %v19 = vld [vmem:[%s0 + $0x38] sm:$0xff]
    %v20 = vld [vmem:[%s0 + $0x40] sm:$0xff]
    %v21 = vld [vmem:[%s0 + $0x48] sm:$0xff]
    %v22 = vld [vmem:[%s0 + $0x50] sm:$0xff]
    %v23 = vld [vmem:[%s0 + $0x58] sm:$0xff]
    %v24 = vld [vmem:[%s0 + $0x60] sm:$0xff]
    %v25 = vld [vmem:[%s0 + $0x68] sm:$0xff]
    %v26 = vld [vmem:[%s0 + $0x70] sm:$0xff]
    %v27 = vld [vmem:[%s0 + $0x78] sm:$0xff]
    %v28 = vld [vmem:[%s1] sm:$0xff]
    %v29 = vld [vmem:[%s1 + $0x8] sm:$0xff]
    %v30 = vld [vmem:[%s1 + $0x10] sm:$0xff]
    %v31 = vld [vmem:[%s1 + $0x18] sm:$0xff]
    %v32 = vld [vmem:[%s1 + $0x20] sm:$0x1]
    %v33 = vlaneseq
    %v34 = vshrl.u32 %v33, 7
    %v35 = vsub.s32 0, %v34
    %v36 = vrot.slane %v32, %v35
    %vm37 = vcmask 261120
    %v39 = vsel %vm37, %v12, 0
    %v42 = vsel %vm37, %v13, 0
    %v45 = vsel %vm37, %v14, 0
    %v48 = vsel %vm37, %v15, 0
    %v51 = vsel %vm37, %v16, 0
    %v54 = vsel %vm37, %v17, 0
    %v57 = vsel %vm37, %v18, 0
    %v60 = vsel %vm37, %v19, 0
    %v63 = vsel %vm37, %v20, 0
    %v66 = vsel %vm37, %v21, 0
    %v69 = vsel %vm37, %v22, 0
    %v72 = vsel %vm37, %v23, 0
    %v75 = vsel %vm37, %v24, 0
    %v78 = vsel %vm37, %v25, 0
    %v81 = vsel %vm37, %v26, 0
    %v84 = vsel %vm37, %v27, 0
    %86 = vmatprep.subr.mxu0 0.0
    %87 = vmatpush1.msra.mxu0 %v28
    %88 = vmatprep.subr.mxu0 0.0
    %89 = vmatpush1.msra.mxu0 %v29
    %90 = vmatprep.subr.mxu0 0.0
    %91 = vmatpush1.msra.mxu0 %v30
    %92 = vmatprep.subr.mxu0 0.0
    %93 = vmatpush1.msra.mxu0 %v31
    %94 = vmatprep.subr.mxu0 0.0
    %95 = vmatpush1.msra.mxu0 0.0
    %96 = vmatprep.subr.mxu0 0.0
    %97 = vmatpush1.msra.mxu0 0.0
    %98 = vmatprep.subr.mxu0 0.0
    %99 = vmatpush1.msra.mxu0 0.0
    %100 = vmatprep.subr.mxu0 0.0
    %101 = vmatpush1.msra.mxu0 0.0
    %102 = vmatprep.subr.mxu0 0.0
    %103 = vmatpush1.msra.mxu0 0.0
    %104 = vmatprep.subr.mxu0 0.0
    %105 = vmatpush1.msra.mxu0 0.0
    %106 = vmatprep.subr.mxu0 0.0
    %107 = vmatpush1.msra.mxu0 0.0
    %108 = vmatprep.subr.mxu0 0.0
    %109 = vmatpush1.msra.mxu0 0.0
    %110 = vmatprep.subr.mxu0 0.0
    %111 = vmatpush1.msra.mxu0 0.0
    %112 = vmatprep.subr.mxu0 0.0
    %113 = vmatpush1.msra.mxu0 0.0
    %114 = vmatprep.subr.mxu0 0.0
    %115 = vmatpush1.msra.mxu0 0.0
    %116 = vmatprep.subr.mxu0 0.0
    %117 = vmatpush1.msra.mxu0 0.0
    %118 = vmatprep.subr.mxu0 0.0
    %119 = vmatpush1.msra.mxu0 0.0
    %120 = vmatprep.subr.mxu0 0.0
    %121 = vmatpush1.msra.mxu0 0.0
    %122 = vmatprep.subr.mxu0 0.0
    %123 = vmatpush1.msra.mxu0 0.0
    %124 = vmatprep.subr.mxu0 0.0
    %125 = vmatpush1.msra.mxu0 0.0
    %126 = vmatprep.subr.mxu0 0.0
    %127 = vmatpush1.msra.mxu0 0.0
    %128 = vmatprep.subr.mxu0 0.0
    %129 = vmatpush1.msra.mxu0 0.0
    %130 = vmatprep.subr.mxu0 0.0
    %131 = vmatpush1.msra.mxu0 0.0
    %132 = vmatprep.subr.mxu0 0.0
    %133 = vmatpush1.msra.mxu0 0.0
    %134 = vmatprep.subr.mxu0 0.0
    %135 = vmatpush1.msra.mxu0 0.0
    %136 = vmatprep.subr.mxu0 0.0
    %137 = vmatpush1.msra.mxu0 0.0
    %138 = vmatprep.subr.mxu0 0.0
    %139 = vmatpush1.msra.mxu0 0.0
    %140 = vmatprep.subr.mxu0 0.0
    %141 = vmatpush1.msra.mxu0 0.0
    %142 = vmatprep.subr.mxu0 0.0
    %143 = vmatpush1.msra.mxu0 0.0
    %144 = vmatprep.subr.mxu0 0.0
    %145 = vmatpush1.msra.mxu0 0.0
    %146 = vmatprep.subr.mxu0 0.0
    %147 = vmatpush1.msra.mxu0 0.0
    %148 = vmatprep.subr.mxu0 0.0
    %149 = vmatpush1.msra.mxu0 0.0
    %150 = vmatprep.mubr.f32.mxu0 0.0
    %151 = vmatmul.mubr.f32.gmra.mrb[0].mxu0 %v39
    %v152 = vpop.f32.mrb[0].mxu0
    %v153 = vadd.f32 %v36, %v152
    %v154 = vpop.f32.mrb[0].mxu0
    %155 = vmatprep.mubr.f32.mxu0 0.0
    %156 = vmatmul.mubr.f32.gmra.mrb[0].mxu0 %v42
    %v157 = vpop.f32.mrb[0].mxu0
    %v158 = vadd.f32 %v36, %v157
    %v159 = vpop.f32.mrb[0].mxu0
    %160 = vmatprep.mubr.f32.mxu0 0.0
    %161 = vmatmul.mubr.f32.gmra.mrb[0].mxu0 %v45
    %v162 = vpop.f32.mrb[0].mxu0
    %v163 = vadd.f32 %v36, %v162
    %v164 = vpop.f32.mrb[0].mxu0
    %165 = vmatprep.mubr.f32.mxu0 0.0
    %166 = vmatmul.mubr.f32.gmra.mrb[0].mxu0 %v48
    %v167 = vpop.f32.mrb[0].mxu0
    %v168 = vadd.f32 %v36, %v167
    %v169 = vpop.f32.mrb[0].mxu0
    %170 = vmatprep.mubr.f32.mxu0 0.0
    %171 = vmatmul.mubr.f32.gmra.mrb[0].mxu0 %v51
    %v172 = vpop.f32.mrb[0].mxu0
    %v173 = vadd.f32 %v36, %v172
    %v174 = vpop.f32.mrb[0].mxu0
    %175 = vmatprep.mubr.f32.mxu0 0.0
    %176 = vmatmul.mubr.f32.gmra.mrb[0].mxu0 %v54
    %v177 = vpop.f32.mrb[0].mxu0
    %v178 = vadd.f32 %v36, %v177
    %v179 = vpop.f32.mrb[0].mxu0
    %180 = vmatprep.mubr.f32.mxu0 0.0
    %181 = vmatmul.mubr.f32.gmra.mrb[0].mxu0 %v57
    %v182 = vpop.f32.mrb[0].mxu0
    %v183 = vadd.f32 %v36, %v182
    %v184 = vpop.f32.mrb[0].mxu0
    %185 = vmatprep.mubr.f32.mxu0 0.0
    %186 = vmatmul.mubr.f32.gmra.mrb[0].mxu0 %v60
    %v187 = vpop.f32.mrb[0].mxu0
    %v188 = vadd.f32 %v36, %v187
    %v189 = vpop.f32.mrb[0].mxu0
    %190 = vmatprep.mubr.f32.mxu0 0.0
    %191 = vmatmul.mubr.f32.gmra.mrb[0].mxu0 %v63
    %v192 = vpop.f32.mrb[0].mxu0
    %v193 = vadd.f32 %v36, %v192
    %v194 = vpop.f32.mrb[0].mxu0
    %195 = vmatprep.mubr.f32.mxu0 0.0
    %196 = vmatmul.mubr.f32.gmra.mrb[0].mxu0 %v66
    %v197 = vpop.f32.mrb[0].mxu0
    %v198 = vadd.f32 %v36, %v197
    %v199 = vpop.f32.mrb[0].mxu0
    %200 = vmatprep.mubr.f32.mxu0 0.0
    %201 = vmatmul.mubr.f32.gmra.mrb[0].mxu0 %v69
    %v202 = vpop.f32.mrb[0].mxu0
    %v203 = vadd.f32 %v36, %v202
    %v204 = vpop.f32.mrb[0].mxu0
    %205 = vmatprep.mubr.f32.mxu0 0.0
    %206 = vmatmul.mubr.f32.gmra.mrb[0].mxu0 %v72
    %v207 = vpop.f32.mrb[0].mxu0
    %v208 = vadd.f32 %v36, %v207
    %v209 = vpop.f32.mrb[0].mxu0
    %210 = vmatprep.mubr.f32.mxu0 0.0
    %211 = vmatmul.mubr.f32.gmra.mrb[0].mxu0 %v75
    %v212 = vpop.f32.mrb[0].mxu0
    %v213 = vadd.f32 %v36, %v212
    %v214 = vpop.f32.mrb[0].mxu0
    %215 = vmatprep.mubr.f32.mxu0 0.0
    %216 = vmatmul.mubr.f32.gmra.mrb[0].mxu0 %v78
    %v217 = vpop.f32.mrb[0].mxu0
    %v218 = vadd.f32 %v36, %v217
    %v219 = vpop.f32.mrb[0].mxu0
    %220 = vmatprep.mubr.f32.mxu0 0.0
    %221 = vmatmul.mubr.f32.gmra.mrb[0].mxu0 %v81
    %v222 = vpop.f32.mrb[0].mxu0
    %v223 = vadd.f32 %v36, %v222
    %v224 = vpop.f32.mrb[0].mxu0
    %225 = vmatprep.mubr.f32.mxu0 0.0
    %226 = vmatmul.mubr.f32.gmra.mrb[0].mxu0 %v84
    %v227 = vpop.f32.mrb[0].mxu0
    %v228 = vadd.f32 %v36, %v227
    %v229 = vpop.f32.mrb[0].mxu0
    %230 = vdwg.mxu0
    %v231 = vlaneseq
    %v232 = vand.u32 %v231, 127
    %vm233 = vcmp.eq.s32.totalorder %v232, 0
    %vm234 = vcmp.eq.s32.totalorder %v232, 1
    %v235 = vsel %vm234, 0.14285715, 1.0
    %v236 = vsel %vm233, 0.14285715, %v235
    %v237 = vtanh.pop %v153
    %v238 = vtanh.pop %v158
    %v239 = vtanh.pop %v163
    %v240 = vtanh.pop %v168
    %v241 = vtanh.pop %v173
    %v242 = vtanh.pop %v178
    %v243 = vtanh.pop %v183
    %v244 = vtanh.pop %v188
    %v245 = vtanh.pop %v193
    %v246 = vtanh.pop %v198
    %v247 = vtanh.pop %v203
    %v248 = vtanh.pop %v208
    %v249 = vtanh.pop %v213
    %v250 = vtanh.pop %v218
    %v251 = vtanh.pop %v223
    %v252 = vtanh.pop %v228
    %v253 = vmul.f32 %v237, %v236
    %v254 = vmul.f32 %v238, %v236
    %v255 = vmul.f32 %v239, %v236
    %v256 = vmul.f32 %v240, %v236
    %v257 = vmul.f32 %v241, %v236
    %v258 = vmul.f32 %v242, %v236
    %v259 = vmul.f32 %v243, %v236
    %v260 = vmul.f32 %v244, %v236
    %v261 = vmul.f32 %v245, %v236
    %v262 = vmul.f32 %v246, %v236
    %v263 = vmul.f32 %v247, %v236
    %v264 = vmul.f32 %v248, %v236
    %v265 = vmul.f32 %v249, %v236
    %v266 = vmul.f32 %v250, %v236
    %v267 = vmul.f32 %v251, %v236
    %v268 = vmul.f32 %v252, %v236
    %v269 = vxor.u32 %v153, 2147483648
    %v270 = vxor.u32 %v158, 2147483648
    %v271 = vxor.u32 %v163, 2147483648
    %v272 = vxor.u32 %v168, 2147483648
    %v273 = vxor.u32 %v173, 2147483648
    %v274 = vxor.u32 %v178, 2147483648
    %v275 = vxor.u32 %v183, 2147483648
    %v276 = vxor.u32 %v188, 2147483648
    %v277 = vxor.u32 %v193, 2147483648
    %v278 = vxor.u32 %v198, 2147483648
    %v279 = vxor.u32 %v203, 2147483648
    %v280 = vxor.u32 %v208, 2147483648
    %v281 = vxor.u32 %v213, 2147483648
    %v282 = vxor.u32 %v218, 2147483648
    %v283 = vxor.u32 %v223, 2147483648
    %v284 = vxor.u32 %v228, 2147483648
    %v285 = vmul.f32 %v269, 1.442695
    %v286 = vpow.pop %v285
    %v287 = vmul.f32 %v270, 1.442695
    %v288 = vpow.pop %v287
    %v289 = vmul.f32 %v271, 1.442695
    %v290 = vpow.pop %v289
    %v291 = vmul.f32 %v272, 1.442695
    %v292 = vpow.pop %v291
    %v293 = vmul.f32 %v273, 1.442695
    %v294 = vpow.pop %v293
    %v295 = vmul.f32 %v274, 1.442695
    %v296 = vpow.pop %v295
    %v297 = vmul.f32 %v275, 1.442695
    %v298 = vpow.pop %v297
    %v299 = vmul.f32 %v276, 1.442695
    %v300 = vpow.pop %v299
    %v301 = vmul.f32 %v277, 1.442695
    %v302 = vpow.pop %v301
    %v303 = vmul.f32 %v278, 1.442695
    %v304 = vpow.pop %v303
    %v305 = vmul.f32 %v279, 1.442695
    %v306 = vpow.pop %v305
    %v307 = vmul.f32 %v280, 1.442695
    %v308 = vpow.pop %v307
    %v309 = vmul.f32 %v281, 1.442695
    %v310 = vpow.pop %v309
    %v311 = vmul.f32 %v282, 1.442695
    %v312 = vpow.pop %v311
    %v313 = vmul.f32 %v283, 1.442695
    %v314 = vpow.pop %v313
    %v315 = vmul.f32 %v284, 1.442695
    %v316 = vpow.pop %v315
    %v317 = vadd.f32 %v286, 1.0
    %v318 = vadd.f32 %v288, 1.0
    %v319 = vadd.f32 %v290, 1.0
    %v320 = vadd.f32 %v292, 1.0
    %v321 = vadd.f32 %v294, 1.0
    %v322 = vadd.f32 %v296, 1.0
    %v323 = vadd.f32 %v298, 1.0
    %v324 = vadd.f32 %v300, 1.0
    %v325 = vadd.f32 %v302, 1.0
    %v326 = vadd.f32 %v304, 1.0
    %v327 = vadd.f32 %v306, 1.0
    %v328 = vadd.f32 %v308, 1.0
    %v329 = vadd.f32 %v310, 1.0
    %v330 = vadd.f32 %v312, 1.0
    %v331 = vadd.f32 %v314, 1.0
    %v332 = vadd.f32 %v316, 1.0
    %v333 = vrcp.pop %v317
    %v334 = vmul.f32 1.0, %v333
    %v335 = vrcp.pop %v318
    %v336 = vmul.f32 1.0, %v335
    %v337 = vrcp.pop %v319
    %v338 = vmul.f32 1.0, %v337
    %v339 = vrcp.pop %v320
    %v340 = vmul.f32 1.0, %v339
    %v341 = vrcp.pop %v321
    %v342 = vmul.f32 1.0, %v341
    %v343 = vrcp.pop %v322
    %v344 = vmul.f32 1.0, %v343
    %v345 = vrcp.pop %v323
    %v346 = vmul.f32 1.0, %v345
    %v347 = vrcp.pop %v324
    %v348 = vmul.f32 1.0, %v347
    %v349 = vrcp.pop %v325
    %v350 = vmul.f32 1.0, %v349
    %v351 = vrcp.pop %v326
    %v352 = vmul.f32 1.0, %v351
    %v353 = vrcp.pop %v327
    %v354 = vmul.f32 1.0, %v353
    %v355 = vrcp.pop %v328
    %v356 = vmul.f32 1.0, %v355
    %v357 = vrcp.pop %v329
    %v358 = vmul.f32 1.0, %v357
    %v359 = vrcp.pop %v330
    %v360 = vmul.f32 1.0, %v359
    %v361 = vrcp.pop %v331
    %v362 = vmul.f32 1.0, %v361
    %v363 = vrcp.pop %v332
    %v364 = vmul.f32 1.0, %v363
    %v365 = vmul.f32 %v334, 9.0
    %v366 = vmul.f32 %v336, 9.0
    %v367 = vmul.f32 %v338, 9.0
    %v368 = vmul.f32 %v340, 9.0
    %v369 = vmul.f32 %v342, 9.0
    %v370 = vmul.f32 %v344, 9.0
    %v371 = vmul.f32 %v346, 9.0
    %v372 = vmul.f32 %v348, 9.0
    %v373 = vmul.f32 %v350, 9.0
    %v374 = vmul.f32 %v352, 9.0
    %v375 = vmul.f32 %v354, 9.0
    %v376 = vmul.f32 %v356, 9.0
    %v377 = vmul.f32 %v358, 9.0
    %v378 = vmul.f32 %v360, 9.0
    %v379 = vmul.f32 %v362, 9.0
    %v380 = vmul.f32 %v364, 9.0
    %v381 = vadd.f32 %v365, 1.0
    %v382 = vadd.f32 %v366, 1.0
    %v383 = vadd.f32 %v367, 1.0
    %v384 = vadd.f32 %v368, 1.0
    %v385 = vadd.f32 %v369, 1.0
    %v386 = vadd.f32 %v370, 1.0
    %v387 = vadd.f32 %v371, 1.0
    %v388 = vadd.f32 %v372, 1.0
    %v389 = vadd.f32 %v373, 1.0
    %v390 = vadd.f32 %v374, 1.0
    %v391 = vadd.f32 %v375, 1.0
    %v392 = vadd.f32 %v376, 1.0
    %v393 = vadd.f32 %v377, 1.0
    %v394 = vadd.f32 %v378, 1.0
    %v395 = vadd.f32 %v379, 1.0
    %v396 = vadd.f32 %v380, 1.0
    %vm397 = vcmp.lt.s32.totalorder %v232, 2
    %vm398 = vcmp.eq.s32.totalorder %v232, 2
    %v399 = vsel %vm398, %v381, 0.0
    %v400 = vsel %vm398, %v382, 0.0
    %v401 = vsel %vm398, %v383, 0.0
    %v402 = vsel %vm398, %v384, 0.0
    %v403 = vsel %vm398, %v385, 0.0
    %v404 = vsel %vm398, %v386, 0.0
    %v405 = vsel %vm398, %v387, 0.0
    %v406 = vsel %vm398, %v388, 0.0
    %v407 = vsel %vm398, %v389, 0.0
    %v408 = vsel %vm398, %v390, 0.0
    %v409 = vsel %vm398, %v391, 0.0
    %v410 = vsel %vm398, %v392, 0.0
    %v411 = vsel %vm398, %v393, 0.0
    %v412 = vsel %vm398, %v394, 0.0
    %v413 = vsel %vm398, %v395, 0.0
    %v414 = vsel %vm398, %v396, 0.0
    %v415 = vsel %vm397, %v253, %v399
    %v416 = vsel %vm397, %v254, %v400
    %v417 = vsel %vm397, %v255, %v401
    %v418 = vsel %vm397, %v256, %v402
    %v419 = vsel %vm397, %v257, %v403
    %v420 = vsel %vm397, %v258, %v404
    %v421 = vsel %vm397, %v259, %v405
    %v422 = vsel %vm397, %v260, %v406
    %v423 = vsel %vm397, %v261, %v407
    %v424 = vsel %vm397, %v262, %v408
    %v425 = vsel %vm397, %v263, %v409
    %v426 = vsel %vm397, %v264, %v410
    %v427 = vsel %vm397, %v265, %v411
    %v428 = vsel %vm397, %v266, %v412
    %v429 = vsel %vm397, %v267, %v413
    %v430 = vsel %vm397, %v268, %v414
    %431 = vst [vmem:[#allocation2] sm:$0xff] %v415
    %432 = vst [vmem:[#allocation2 + $0x8] sm:$0xff] %v416
    %433 = vst [vmem:[#allocation2 + $0x10] sm:$0xff] %v417
    %434 = vst [vmem:[#allocation2 + $0x18] sm:$0xff] %v418
    %435 = vst [vmem:[#allocation2 + $0x20] sm:$0xff] %v419
    %436 = vst [vmem:[#allocation2 + $0x28] sm:$0xff] %v420
    %437 = vst [vmem:[#allocation2 + $0x30] sm:$0xff] %v421
    %438 = vst [vmem:[#allocation2 + $0x38] sm:$0xff] %v422
    %439 = vst [vmem:[#allocation2 + $0x40] sm:$0xff] %v423
    %440 = vst [vmem:[#allocation2 + $0x48] sm:$0xff] %v424
    %441 = vst [vmem:[#allocation2 + $0x50] sm:$0xff] %v425
    %442 = vst [vmem:[#allocation2 + $0x58] sm:$0xff] %v426
    %443 = vst [vmem:[#allocation2 + $0x60] sm:$0xff] %v427
    %444 = vst [vmem:[#allocation2 + $0x68] sm:$0xff] %v428
    %445 = vst [vmem:[#allocation2 + $0x70] sm:$0xff] %v429
    %446 = vst [vmem:[#allocation2 + $0x78] sm:$0xff] %v430
    // Predicated region
    $region10: #{tpu_custom_call.1} parent=1 // pred_check
      _
    $region11: #{tpu_custom_call.1} parent=1 // pred_check_branch
      %448 = sbr.rel (0) target = $region13
    $region12: #{tpu_custom_call.1} parent=1 // pred_region
      %s450 = ssub.s32 2048, 2048
      %451 = vsyncadd [#allocation3], %s450
      %s452 = sshll.u32 [#allocation2], 4
      %s453 = int_to_ptr.vmem [resolvable:$true] %s452
      %458 = dma.vmem_to_hbm [thread:$0]  %s453, 2048, %s2, [#allocation3], 128, 128, 8
    $region13: #{tpu_custom_call.1} parent=1 // pred_fallthru
      _
    // Predicated region
    $region14: #{tpu_custom_call.1} parent=1 // pred_check
      _
    $region15: #{tpu_custom_call.1} parent=1 // pred_check_branch
      %460 = sbr.rel (0) target = $region17
    $region16: #{tpu_custom_call.1} parent=1 // pred_region
      %461 = dma.done [#allocation3], 2048
    $region17: #{tpu_custom_call.1} parent=1 // pred_fallthru
      _
    %462 = vsyncpa [#allocation3], 1

</llo_original>
